<compile_context>
chip_gen: v6e
topology: v6e:2x2x1
jax: 0.10.0
libtpu: 0.0.40
codegen_flags: <defaults>
</compile_context>

<pallas_src>
import functools
import math

import jax
import jax.numpy as jnp
from jax.experimental import pallas as pl
from jax.experimental.pallas import tpu as pltpu


# ----------------------------- small helpers --------------------------------

def _cdiv(a: int, b: int) -> int:
    return -(-a // b)


def _round_up(x: int, m: int) -> int:
    return (x + m - 1) // m * m


def _vmem_capacity_bytes() -> int:
    """Physical per-core VMEM; conservative 64 MiB (v7x) fallback."""
    try:
        cap = int(pltpu.get_tpu_info().vmem_capacity_bytes)
        if cap > 0:
            return cap
    except Exception:
        pass
    return 64 << 20


def _pick_batch_tile(n: int) -> int:
    """>=2 batch tiles whenever possible so v7x's second TensorCore is used."""
    if n <= 1:
        return 1
    if n <= 32:
        return max(1, (n + 1) // 2)      # exactly 2 batch tiles
    return 16


def _pick_seq_tile(seq: int, tile_b: int, d: int, itemsize: int,
                   n_streams: int = 1) -> int:
    """Largest seq tile (multiple of 8) keeping the double-buffered streamed
    blocks within ~40% of VMEM (blocks of several MiB -> per-step overhead
    amortised), capped at 16 MiB per block."""
    cap = _vmem_capacity_bytes()
    budget = int(cap * 0.4)
    per_block = budget // max(2 * n_streams, 2)
    per_block = max(1 << 20, min(per_block, 16 << 20))
    row_bytes = max(tile_b * d * itemsize, 1)
    ts = (per_block // row_bytes) // 8 * 8
    return max(8, min(ts, _round_up(seq, 8)))


def _vmem_limit_bytes(*buf_bytes: int) -> int:
    """Double-buffered blocks + headroom; ceiling = physical VMEM - 8 MiB
    (so v7x keeps headroom, v5e/v6e can exceed 64 MiB)."""
    cap = _vmem_capacity_bytes()
    need = sum(2 * int(b) for b in buf_bytes) + (8 << 20)
    ceiling = max(cap - (8 << 20), 16 << 20)
    return int(min(max(need, 32 << 20), ceiling))


# ------------------- Kernel 1: Summary_hiddens (the module) ------------------

def _summary_kernel(x_ref, out_ref, acc_ref, *,
                    seq_len, tile_s, n_seq_tiles, inv_len):
    """out[b] = sigmoid(mean_s x[b, s, :]); seq-sum accumulated across seq tiles.
    No wrapper padding: the ragged last seq tile is masked in-kernel."""
    s = pl.program_id(1)

    @pl.when(s == 0)
    def _init():
        acc_ref[...] = jnp.zeros_like(acc_ref)

    def _accum(xblk):
        # f32 accumulation; for f32 inputs the astype is a no-op (no extra copy).
        # TODO(synk): for bf16 inputs, an MXU ones-contraction would avoid the cast.
        acc_ref[...] += jnp.sum(xblk.astype(jnp.float32), axis=1, keepdims=True)

    rem = seq_len - (n_seq_tiles - 1) * tile_s       # valid rows in last tile (static)

    if rem == tile_s:                                # seq divides evenly: never mask
        _accum(x_ref[...])
    else:
        @pl.when(s < n_seq_tiles - 1)
        def _full():
            _accum(x_ref[...])

        @pl.when(s == n_seq_tiles - 1)
        def _ragged():
            x = x_ref[...]
            sidx = jax.lax.broadcasted_iota(jnp.int32, (x.shape[0], tile_s, 1), 1)
            _accum(jnp.where(sidx < rem, x, 0.0))    # select: OOB garbage is safe

    @pl.when(s == n_seq_tiles - 1)
    def _finalize():
        out_ref[...] = jax.nn.sigmoid(acc_ref[...] * inv_len).astype(out_ref.dtype)


def summary_hiddens(tensor, *, tile_s=None):
    """Pallas implementation of Summary_hiddens.forward (2-D or 3-D input)."""
    assert tensor.ndim in (2, 3)
    squeeze = tensor.ndim == 2
    x = tensor[None] if squeeze else tensor          # (B, S, D)
    B, S, D = x.shape
    itemsize = jnp.dtype(x.dtype).itemsize

    tb = _pick_batch_tile(B)
    ts = tile_s if tile_s is not None else _pick_seq_tile(S, tb, D, itemsize, 1)
    ts = max(8, (ts // 8) * 8)

    n_bt = _cdiv(B, tb)
    n_st = _cdiv(S, ts)

    kernel = functools.partial(_summary_kernel, seq_len=S, tile_s=ts,
                               n_seq_tiles=n_st, inv_len=1.0 / S)

    out = pl.pallas_call(
        kernel,
        out_shape=jax.ShapeDtypeStruct((B, 1, D), jnp.float32),
        grid_spec=pltpu.PrefetchScalarGridSpec(
            num_scalar_prefetch=0,
            grid=(n_bt, n_st),
            in_specs=[pl.BlockSpec((tb, ts, D), lambda b, s: (b, s, 0))],
            out_specs=pl.BlockSpec((tb, 1, D), lambda b, s: (b, 0, 0)),
            scratch_shapes=[pltpu.VMEM((tb, 1, D), jnp.float32)],
        ),
        compiler_params=pltpu.CompilerParams(
            dimension_semantics=("parallel", "arbitrary"),
            vmem_limit_bytes=_vmem_limit_bytes(tb * ts * D * itemsize, tb * D * 4),
        ),
    )(x)

    out = out[:, 0, :].astype(tensor.dtype)
    return out[0] if squeeze else out


# --------- Kernel 2: streamed bilinear scores + BCE accumulation -------------

def _bilinear_bce_kernel(uv_ref, y_ref, bias_ref, out_ref, acc_ref, *,
                         labels, seq_len, b_true, tile_b, tile_s, n_seq_tiles):
    b = pl.program_id(0)
    s = pl.program_id(1)

    @pl.when(s == 0)
    def _init():
        acc_ref[...] = jnp.zeros_like(acc_ref)

    y = y_ref[...]                                       # (tb, ts, D) streamed dtype
    uv = uv_ref[...][:, :len(labels), :].astype(y.dtype)  # (tb, n_rows, D)
    bias = bias_ref[0]

    # One batched MXU contraction over D gives all needed scores for this tile.
    scores = jnp.einsum("bnd,bsd->bns", uv, y,
                        preferred_element_type=jnp.float32)   # (tb, n_rows, ts)

    seq_idx = s * tile_s + jax.lax.broadcasted_iota(jnp.int32, (tile_b, tile_s), 1)
    bat_idx = b * tile_b + jax.lax.broadcasted_iota(jnp.int32, (tile_b, tile_s), 0)
    valid = (seq_idx < seq_len) & (bat_idx < b_true)

    contrib = jnp.zeros((tile_b, tile_s), jnp.float32)
    for row, label in enumerate(labels):                 # static unroll (<=2 rows)
        logit = scores[:, row, :] + bias
        # numerically-stable BCEWithLogits
        bce = (jnp.maximum(logit, 0.0) - logit * label
               + jnp.log1p(jnp.exp(-jnp.abs(logit))))
        contrib = contrib + jnp.where(valid, bce, 0.0)

    acc_ref[...] += contrib                              # elementwise accumulate

    @pl.when(s == n_seq_tiles - 1)
    def _finalize():
        # Single full reduce per batch tile, written as one lane-dense block.
        out_ref[...] = jnp.broadcast_to(jnp.sum(acc_ref[...]), out_ref.shape)


def _bce_stream(uv, y, bias, *, labels, tile_s=None):
    """Stream y tiles, score against the stacked [u, uf] operand and return the
    per-batch-tile BCE partial sums."""
    B, S, D = y.shape
    itemsize = jnp.dtype(y.dtype).itemsize

    tb = _pick_batch_tile(B)
    ts = tile_s if tile_s is not None else _pick_seq_tile(S, tb, D, itemsize, 1)
    ts = max(8, (ts // 8) * 8)

    n_bt = _cdiv(B, tb)
    n_st = _cdiv(S, ts)

    kernel = functools.partial(_bilinear_bce_kernel, labels=tuple(labels),
                               seq_len=S, b_true=B, tile_b=tb, tile_s=ts,
                               n_seq_tiles=n_st)

    out = pl.pallas_call(
        kernel,
        out_shape=jax.ShapeDtypeStruct((n_bt, 8, 128), jnp.float32),
        grid_spec=pltpu.PrefetchScalarGridSpec(
            num_scalar_prefetch=0,
            grid=(n_bt, n_st),
            in_specs=[
                pl.BlockSpec((tb, 2, D), lambda b, s: (b, 0, 0)),      # [u, uf]
                pl.BlockSpec((tb, ts, D), lambda b, s: (b, s, 0)),     # y tile
                pl.BlockSpec(memory_space=pltpu.MemorySpace.SMEM),     # bias (1,)
            ],
            out_specs=pl.BlockSpec((1, 8, 128), lambda b, s: (b, 0, 0)),
            scratch_shapes=[pltpu.VMEM((tb, ts), jnp.float32)],
        ),
        compiler_params=pltpu.CompilerParams(
            dimension_semantics=("parallel", "arbitrary"),
            vmem_limit_bytes=_vmem_limit_bytes(
                tb * ts * D * itemsize, tb * 2 * D * 4, 8 * 128 * 4),
        ),
    )(uv, y, bias)
    return out[:, 0, 0]


def mim_loss(x_enc, x_fake, y_enc, y_fake, w, bias, *, tile_s_x=None, tile_s_y=None):
    B, Sx, D = x_enc.shape
    _, S1, _ = y_enc.shape
    _, S2, _ = y_fake.shape

    # ---- Summary_hiddens on each encoder output (no big concatenate / pad) ---
    xs = summary_hiddens(x_enc, tile_s=tile_s_x).astype(jnp.float32)
    xfs = summary_hiddens(x_fake, tile_s=tile_s_x).astype(jnp.float32)

    # Tiny stacked (2B, D) @ (D, D) matmul in the wrapper (not bandwidth-relevant).
    summ = jnp.concatenate([xs, xfs], axis=0)
    u_all = jnp.dot(summ, w.astype(jnp.float32), preferred_element_type=jnp.float32)
    uv = jnp.stack([u_all[:B], u_all[B:2 * B]], axis=1)   # (B, 2, D): [u, uf]

    bias1 = bias.reshape((1,)).astype(jnp.float32)

    # y_enc tiles feed both l1 (u.y, label 1) and l3 (uf.y, label 0);
    # y_fake tiles feed l2 (u.y, label 0).
    part_e = _bce_stream(uv, y_enc, bias1, labels=(1.0, 0.0), tile_s=tile_s_y)
    part_f = _bce_stream(uv, y_fake, bias1, labels=(0.0,), tile_s=tile_s_y)

    total = jnp.sum(part_e) + jnp.sum(part_f)
    count = B * (2 * S1 + S2)
    return total / count


# ----------------------------- pure-JAX references ---------------------------

def summary_hiddens_ref(t):
    axis = 1 if t.ndim == 3 else 0
    return jax.nn.sigmoid(jnp.mean(t, axis=axis))


def mim_loss_ref(x_enc, x_fake, y_enc, y_fake, w, bias):
    xs = jax.nn.sigmoid(jnp.mean(x_enc, axis=1))
    xfs = jax.nn.sigmoid(jnp.mean(x_fake, axis=1))
    u = jnp.dot(xs, w, preferred_element_type=jnp.float32)
    uf = jnp.dot(xfs, w, preferred_element_type=jnp.float32)

    def scores(a, y):
        return jnp.einsum('bd,bsd->bs', a, y) + bias[0]

    l1, l2, l3 = scores(u, y_enc), scores(u, y_fake), scores(uf, y_enc)
    logits = jnp.concatenate([l1, l2, l3], axis=1)
    labels = jnp.concatenate(
        [jnp.ones_like(l1), jnp.zeros_like(l2), jnp.zeros_like(l3)], axis=1)
    return jnp.mean(jnp.maximum(logits, 0.0) - logits * labels
                    + jnp.log1p(jnp.exp(-jnp.abs(logits))))


# ------------------------------------ test -----------------------------------

if __name__ == "__main__":
    # B=3 / Sx=12 / S1=20 with tile 8 exercise ragged batch AND ragged seq tiles.
    B, Sx, S1, S2, D = 3, 12, 20, 16, 256

    key = jax.random.PRNGKey(0)
    k_x, k_xf, k_ye, k_yf, k_w, k_t2 = jax.random.split(key, 6)

    x_enc = jax.random.normal(k_x, (B, Sx, D), dtype=jnp.float32)
    x_fake = jax.random.normal(k_xf, (B, Sx, D), dtype=jnp.float32)
    y_enc = jax.random.normal(k_ye, (B, S1, D), dtype=jnp.float32)
    y_fake = jax.random.normal(k_yf, (B, S2, D), dtype=jnp.float32)

    # nn.Bilinear(D, D, 1): weight xavier-style bound, bias zeros.
    bound = math.sqrt(6.0 / (D * D + D))
    w = jax.random.uniform(k_w, (D, D), dtype=jnp.float32, minval=-bound, maxval=bound)
    bias = jnp.zeros((1,), dtype=jnp.float32)

    # --- Summary_hiddens module itself: 3-D (tiled + auto-tiled) and 2-D paths --
    s3 = jax.block_until_ready(summary_hiddens(x_enc, tile_s=8))
    assert jnp.allclose(s3, summary_hiddens_ref(x_enc), rtol=1e-5, atol=1e-5)

    s3_auto = jax.block_until_ready(summary_hiddens(x_enc))
    assert jnp.allclose(s3_auto, summary_hiddens_ref(x_enc), rtol=1e-5, atol=1e-5)

    t2 = jax.random.normal(k_t2, (Sx, D), dtype=jnp.float32)
    s2d = jax.block_until_ready(summary_hiddens(t2))
    assert jnp.allclose(s2d, summary_hiddens_ref(t2), rtol=1e-5, atol=1e-5)

    # --- full MIM-loss pipeline (f32 streaming, gridded/pipelined) -------------
    loss = jax.block_until_ready(
        mim_loss(x_enc, x_fake, y_enc, y_fake, w, bias, tile_s_x=8, tile_s_y=8))
    loss_ref = mim_loss_ref(x_enc, x_fake, y_enc, y_fake, w, bias)
    assert jnp.allclose(loss, loss_ref, rtol=2e-3, atol=2e-3), (loss, loss_ref)

    loss_auto = jax.block_until_ready(mim_loss(x_enc, x_fake, y_enc, y_fake, w, bias))
    assert jnp.allclose(loss_auto, loss_ref, rtol=2e-3, atol=2e-3), (loss_auto, loss_ref)

    print("KERNEL_OK")
</pallas_src>

<mosaic_0001>
module attributes {stable_mosaic.version = 11 : i64} {
  func.func @_summary_kernel(%arg0: i32, %arg1: i32, %arg2: memref<2x8x256xf32, #tpu.memory_space<vmem>>, %arg3: memref<2x1x256xf32, #tpu.memory_space<vmem>>, %arg4: memref<2x1x256xf32, #tpu.memory_space<vmem>>) attributes {dimension_semantics = [#tpu.dimension_semantics<parallel>, #tpu.dimension_semantics<arbitrary>], iteration_bounds = array<i64: 2, 2>, scalar_prefetch = 0 : i64, scratch_operands = 1 : i64, tpu.core_type = #tpu.core_type<tc>, window_params = [{transform_indices = @transform_0, window_bounds = array<i64: 2, 8, 256>}, {transform_indices = @transform_1, window_bounds = array<i64: 2, 1, 256>}]} {
    %c0_i32 = arith.constant 0 : i32
    %0 = arith.cmpi eq, %arg1, %c0_i32 : i32
    %1 = arith.extui %0 : i1 to i32
    %c0_i32_0 = arith.constant 0 : i32
    %2 = arith.cmpi ne, %1, %c0_i32_0 : i32
    scf.if %2 {
      %cst = arith.constant 0.000000e+00 : f32
      %12 = vector.broadcast %cst : f32 to vector<2x1x256xf32>
      %c0 = arith.constant 0 : index
      %c0_6 = arith.constant 0 : index
      %c0_7 = arith.constant 0 : index
      %13 = vector.load %arg4[%c0, %c0_6, %c0_7] : memref<2x1x256xf32, #tpu.memory_space<vmem>>, vector<2x1x256xf32>
      tpu.vector_store %arg4[%c0, %c0_6, %c0_7], %12 {strides = array<i32>} : memref<2x1x256xf32, #tpu.memory_space<vmem>>, vector<2x1x256xf32>,
    } else {
    }
    %c1_i32 = arith.constant 1 : i32
    %3 = arith.cmpi slt, %arg1, %c1_i32 : i32
    %4 = arith.extui %3 : i1 to i32
    %c0_i32_1 = arith.constant 0 : i32
    %5 = arith.cmpi ne, %4, %c0_i32_1 : i32
    scf.if %5 {
      %c0 = arith.constant 0 : index
      %c0_6 = arith.constant 0 : index
      %c0_7 = arith.constant 0 : index
      %12 = vector.load %arg2[%c0, %c0_6, %c0_7] : memref<2x8x256xf32, #tpu.memory_space<vmem>>, vector<2x8x256xf32>
      %c0_8 = arith.constant 0 : index
      %c0_9 = arith.constant 0 : index
      %c0_10 = arith.constant 0 : index
      %13 = vector.load %arg4[%c0_8, %c0_9, %c0_10] : memref<2x1x256xf32, #tpu.memory_space<vmem>>, vector<2x1x256xf32>
      %cst = arith.constant dense<0.000000e+00> : vector<2x256xf32>
      %14 = vector.multi_reduction <add>, %12, %cst [1] : vector<2x8x256xf32> to vector<2x256xf32>
      %15 = vector.shape_cast %14 : vector<2x256xf32> to vector<2x1x256xf32>
      %16 = arith.addf %13, %15 : vector<2x1x256xf32>
      %c0_11 = arith.constant 0 : index
      %c0_12 = arith.constant 0 : index
      %c0_13 = arith.constant 0 : index
      %17 = vector.load %arg4[%c0_11, %c0_12, %c0_13] : memref<2x1x256xf32, #tpu.memory_space<vmem>>, vector<2x1x256xf32>
      tpu.vector_store %arg4[%c0_11, %c0_12, %c0_13], %16 {strides = array<i32>} : memref<2x1x256xf32, #tpu.memory_space<vmem>>, vector<2x1x256xf32>,
    } else {
    }
    %c1_i32_2 = arith.constant 1 : i32
    %6 = arith.cmpi eq, %arg1, %c1_i32_2 : i32
    %7 = arith.extui %6 : i1 to i32
    %c0_i32_3 = arith.constant 0 : i32
    %8 = arith.cmpi ne, %7, %c0_i32_3 : i32
    scf.if %8 {
      %c0 = arith.constant 0 : index
      %c0_6 = arith.constant 0 : index
      %c0_7 = arith.constant 0 : index
      %12 = vector.load %arg2[%c0, %c0_6, %c0_7] : memref<2x8x256xf32, #tpu.memory_space<vmem>>, vector<2x8x256xf32>
      %13 = tpu.iota {dimensions = array<i32: 1>} : vector<2x8x1xi32>
      %c4_i32 = arith.constant 4 : i32
      %14 = vector.broadcast %c4_i32 : i32 to vector<2x8x1xi32>
      %15 = arith.cmpi slt, %13, %14 : vector<2x8x1xi32>
      %cst = arith.constant 0.000000e+00 : f32
      %16 = vector.shape_cast %15 : vector<2x8x1xi1> to vector<2x8x1xi1>
      %17 = vector.broadcast %16 : vector<2x8x1xi1> to vector<2x8x256xi1>
      %18 = vector.broadcast %cst : f32 to vector<2x8x256xf32>
      %19 = arith.select %17, %12, %18 : vector<2x8x256xi1>, vector<2x8x256xf32>
      %c0_8 = arith.constant 0 : index
      %c0_9 = arith.constant 0 : index
      %c0_10 = arith.constant 0 : index
      %20 = vector.load %arg4[%c0_8, %c0_9, %c0_10] : memref<2x1x256xf32, #tpu.memory_space<vmem>>, vector<2x1x256xf32>
      %cst_11 = arith.constant dense<0.000000e+00> : vector<2x256xf32>
      %21 = vector.multi_reduction <add>, %19, %cst_11 [1] : vector<2x8x256xf32> to vector<2x256xf32>
      %22 = vector.shape_cast %21 : vector<2x256xf32> to vector<2x1x256xf32>
      %23 = arith.addf %20, %22 : vector<2x1x256xf32>
      %c0_12 = arith.constant 0 : index
      %c0_13 = arith.constant 0 : index
      %c0_14 = arith.constant 0 : index
      %24 = vector.load %arg4[%c0_12, %c0_13, %c0_14] : memref<2x1x256xf32, #tpu.memory_space<vmem>>, vector<2x1x256xf32>
      tpu.vector_store %arg4[%c0_12, %c0_13, %c0_14], %23 {strides = array<i32>} : memref<2x1x256xf32, #tpu.memory_space<vmem>>, vector<2x1x256xf32>,
    } else {
    }
    %c1_i32_4 = arith.constant 1 : i32
    %9 = arith.cmpi eq, %arg1, %c1_i32_4 : i32
    %10 = arith.extui %9 : i1 to i32
    %c0_i32_5 = arith.constant 0 : i32
    %11 = arith.cmpi ne, %10, %c0_i32_5 : i32
    scf.if %11 {
      %c0 = arith.constant 0 : index
      %c0_6 = arith.constant 0 : index
      %c0_7 = arith.constant 0 : index
      %12 = vector.load %arg4[%c0, %c0_6, %c0_7] : memref<2x1x256xf32, #tpu.memory_space<vmem>>, vector<2x1x256xf32>
      %cst = arith.constant 0.0833333358 : f32
      %13 = vector.broadcast %cst : f32 to vector<2x1x256xf32>
      %14 = arith.mulf %12, %13 : vector<2x1x256xf32>
      %15 = arith.negf %14 : vector<2x1x256xf32>
      %16 = math.exp %15 : vector<2x1x256xf32>
      %cst_8 = arith.constant 1.000000e+00 : f32
      %17 = vector.broadcast %cst_8 : f32 to vector<2x1x256xf32>
      %18 = arith.addf %17, %16 : vector<2x1x256xf32>
      %19 = arith.divf %17, %18 : vector<2x1x256xf32>
      %c0_9 = arith.constant 0 : index
      %c0_10 = arith.constant 0 : index
      %c0_11 = arith.constant 0 : index
      %20 = vector.load %arg3[%c0_9, %c0_10, %c0_11] : memref<2x1x256xf32, #tpu.memory_space<vmem>>, vector<2x1x256xf32>
      tpu.vector_store %arg3[%c0_9, %c0_10, %c0_11], %19 {strides = array<i32>} : memref<2x1x256xf32, #tpu.memory_space<vmem>>, vector<2x1x256xf32>,
    } else {
    }
    return
  }
  func.func @transform_0(%arg0: i32, %arg1: i32) -> (i32, i32, i32) {
    %c0_i32 = arith.constant 0 : i32
    %c0_i32_0 = arith.constant 0 : i32
    return %arg0, %arg1, %c0_i32 : i32, i32, i32
  }
  func.func @transform_1(%arg0: i32, %arg1: i32) -> (i32, i32, i32) {
    %c0_i32 = arith.constant 0 : i32
    %c0_i32_0 = arith.constant 0 : i32
    %c0_i32_1 = arith.constant 0 : i32
    return %arg0, %c0_i32, %c0_i32_0 : i32, i32, i32
  }
}

</mosaic_0001>

<llo_original>
// kernel: tpu_custom_call.1
$region0: #{tpu_custom_call.1}
  #allocation0 [shape = 'u32[]', space=smem, size = 0x4, offset = 0x4, fixed_abs, tag = 'smem constant byte address 0x4 - core index']
  #allocation1 [shape = 'u32[144,128]{1,0:T(1,128)}', space=vmem, size = 0x12000, scoped, tag = 'internal scratch']
  #allocation2 [shape = 'f32[2,1,256]{2,1,0:T(1,128)}', space=vmem, size = 0x800, scoped, tag = 'scratch operand']
  %s0 = inlined_call_operand.hbm [shape: f32[3,12,256], index: 0, kind: input, shape index: {}]
  %s1 = inlined_call_operand.hbm [shape: f32[3,1,256], index: 1, kind: output, shape index: {}]
  %s2 = sld [smem:[#allocation0]]
  $region53: #{tpu_custom_call.1} parent=0
    _
  %s4 = ssub.s32 1, %s2
  %s5 = scalar_select 0, %s4, %s2
  $region1: #{tpu_custom_call.1} parent=0
    #allocation3 [shape = 'u8[32768]{0}', space=vmem, size = 0x8000, scoped, tag = 'input window, operand 0']
    #allocation4 [shape = 's32[2]{0}', space=sflag, size = 0x8, scoped, tag = 'scoped memory for tpu_custom_call.1']
    #allocation5 [shape = 's32[2]{0}', space=sflag, size = 0x8, scoped, tag = 'scoped memory for tpu_custom_call.1']
    #allocation6 [shape = 'u8[4096]{0}', space=vmem, size = 0x1000, scoped, tag = 'output window, operand 0']
    %6 = vsyncpa [#allocation4], 0
    %s7 = scalar_lea.sflag [#allocation4], 1
    %8 = vsyncpa %s7, 0
    %9 = vsyncpa [#allocation5], 0
    %s10 = scalar_lea.sflag [#allocation5], 1
    %11 = vsyncpa %s10, 0
    loop: start=0, step=1, limit=6
    $region2: #{tpu_custom_call.1} parent=1 // loop_pre_header
      _
    $region3: #{tpu_custom_call.1} parent=1 // loop_header
      %s13 = sphi 0, %s17
      %p14 = scmp.ge.s32.totalorder %s13, 6
      %s20 = sphi 0, %s32
      %s21 = sphi 0, %s28
      %s22 = sphi 0, %s20
      %s23 = sphi 0, %s21
      %s24 = sphi 0, %s22
      %s25 = sphi 0, %s23
      %s37 = sphi 0, %s39
      %s40 = sphi 0, %s37
      %s41 = sphi 0, %s40
      %s57 = sphi 0, %s41
      %s63 = sphi 0, %s65
      %s66 = sphi 0, %s63
      %s67 = sphi 0, %s66
      %s83 = sphi 0, %s67
    $region4: #{tpu_custom_call.1} parent=1 // loop_header_branch
      %16 = sbr.rel (%p14) target = $region8
    $region5: #{tpu_custom_call.1} parent=1 // loop_body
      %s18 = ssub.s32 %s13, 1
      %s19 = ssub.s32 %s13, 2
      %s26 = sadd.s32 1, %s21
      %p27 = scmp.ge.s32.totalorder %s26, 2
      %s28 = scalar_select %p27, 0, %s26
      %s29 = sadd.s32 1, %s20
      %s30 = scalar_select %p27, %s29, %s20
      %p31 = scmp.ge.s32.totalorder %s30, 2
      %s32 = scalar_select %p31, 0, %s30
      %s33 = ssub.s32 %s20, %s32
      %s34 = ssub.s32 %s21, %s28
      %s35 = sor.u32 %s33, %s34
      %p36 = scmp.eq.s32.totalorder %s35, 0
      %s38 = sadd.s32 %s37, 1
      %s39 = scalar_select %p36, %s37, %s38
      %p42 = pneg %p36
      %p43 = scmp.eq.s32.totalorder %s13, 3
      %p44 = por %p42, %p43
      %p45 = scmp.ne.s32.totalorder %s37, %s40
      %p46 = scmp.eq.s32.totalorder %s13, 0
      %p47 = por %p45, %p46
      %p48 = scmp.ne.s32.totalorder %s37, %s40
      %p49 = scmp.eq.s32.totalorder %s18, 3
      %p50 = por %p48, %p49
      %p51 = scmp.ne.s32.totalorder %s40, %s41
      %p52 = scmp.eq.s32.totalorder %s18, 0
      %p53 = por %p51, %p52
      %p54 = scmp.ne.s32.totalorder %s40, %s41
      %p55 = scmp.eq.s32.totalorder %s19, 3
      %p56 = por %p54, %p55
      %p58 = scmp.ne.s32.totalorder %s41, %s57
      %p59 = scmp.eq.s32.totalorder %s19, 0
      %p60 = por %p58, %p59
      %s61 = ssub.s32 %s20, %s32
      %p62 = scmp.eq.s32.totalorder %s61, 0
      %s64 = sadd.s32 %s63, 1
      %s65 = scalar_select %p62, %s63, %s64
      %p68 = pneg %p62
      %p69 = scmp.eq.s32.totalorder %s13, 3
      %p70 = por %p68, %p69
      %p71 = scmp.ne.s32.totalorder %s63, %s66
      %p72 = scmp.eq.s32.totalorder %s13, 0
      %p73 = por %p71, %p72
      %p74 = scmp.ne.s32.totalorder %s63, %s66
      %p75 = scmp.eq.s32.totalorder %s18, 3
      %p76 = por %p74, %p75
      %p77 = scmp.ne.s32.totalorder %s66, %s67
      %p78 = scmp.eq.s32.totalorder %s18, 0
      %p79 = por %p77, %p78
      %p80 = scmp.ne.s32.totalorder %s66, %s67
      %p81 = scmp.eq.s32.totalorder %s19, 3
      %p82 = por %p80, %p81
      %p84 = scmp.ne.s32.totalorder %s67, %s83
      %p85 = scmp.eq.s32.totalorder %s19, 0
      %p86 = por %p84, %p85
      %p87 = scmp.le.s32.totalorder 1, %s13
      %p88 = scmp.lt.s32.totalorder %s13, 5
      %p89 = pnand %p87, %p88
      %p90 = pneg %p89
      // Predicated region
      $region9: #{tpu_custom_call.1} parent=5 // pred_check
        _
      $region10: #{tpu_custom_call.1} parent=5 // pred_check_branch
        %92 = sbr.rel (%p89) target = $region12
      $region11: #{tpu_custom_call.1} parent=5 // pred_region
        %s93 = ssub.s32 %s13, 1
      $region12: #{tpu_custom_call.1} parent=5 // pred_fallthru
        _
      %p94 = scmp.lt.s32.totalorder %s13, 4
      // Predicated region
      $region13: #{tpu_custom_call.1} parent=5 // pred_check
        %p95 = pneg %p94
      $region14: #{tpu_custom_call.1} parent=5 // pred_check_branch
        %97 = sbr.rel (%p95) target = $region16
      $region15: #{tpu_custom_call.1} parent=5 // pred_region
        // Predicated region
        $region17: #{tpu_custom_call.1} parent=15 // pred_check
          %p98 = pneg %p47
        $region18: #{tpu_custom_call.1} parent=15 // pred_check_branch
          %100 = sbr.rel (%p98) target = $region20
        $region19: #{tpu_custom_call.1} parent=15 // pred_region
          %s101 = sand.u32 %s37, 1
          %s102 = scalar_lea.sflag [#allocation4], %s101
          %s103 = sand.u32 %s37, 1
          %s104 = smul.addr %s103, 32
          %s105 = scalar_lea.vmem [#allocation3], %s104
          %s106 = smul.u32 2, %s20
          %s107 = ssub.s32 3, %s106
          %p108 = scmp.lt.s32.totalorder %s107, 2
          %s109 = scalar_select %p108, %s107, 2
          %s110 = smul.u32 128, %s109
          %s111 = smul.u32 %s110, 2
          %s113 = ssub.s32 512, %s111
          %114 = vsyncadd %s102, %s113
          %p115 = scmp.ne.s32.totalorder 0, %s111
          %s116 = smul.addr %s21, 2
          %s117 = smul.addr %s106, 4
          %s118 = sadd.s32 %s116, %s117
          %s119 = smul.addr %s118, 128
          %s120 = scalar_lea.hbm %s0, %s119
          %s121 = smul.u32 16, %s109
          %s122 = sshll.u32 %s105, 4
          %s123 = int_to_ptr.vmem [resolvable:$true] %s122
          %s124 = sshll.u32 %s121, 4
          %128 = dma.hbm_to_vmem [thread:$0]  (%p115), %s120, %s124, %s123, %s102, 512, 256, 16
        $region20: #{tpu_custom_call.1} parent=15 // pred_fallthru
          _
      $region16: #{tpu_custom_call.1} parent=5 // pred_fallthru
        _
      %p129 = scmp.le.s32.totalorder 1, %s13
      %p130 = scmp.lt.s32.totalorder %s13, 5
      %p131 = pnand %p129, %p130
      %p132 = pneg %p131
      // Predicated region
      $region21: #{tpu_custom_call.1} parent=5 // pred_check
        _
      $region22: #{tpu_custom_call.1} parent=5 // pred_check_branch
        %134 = sbr.rel (%p131) target = $region24
      $region23: #{tpu_custom_call.1} parent=5 // pred_region
        %s135 = ssub.s32 %s13, 1
        %s136 = sand.u32 %s40, 1
        %s137 = scalar_lea.sflag [#allocation4], %s136
        %s138 = sand.u32 %s40, 1
        %s139 = smul.addr %s138, 32
        %s140 = scalar_lea.vmem [#allocation3], %s139
        // Predicated region
        $region25: #{tpu_custom_call.1} parent=23 // pred_check
          %p141 = pneg %p53
        $region26: #{tpu_custom_call.1} parent=23 // pred_check_branch
          %143 = sbr.rel (%p141) target = $region28
        $region27: #{tpu_custom_call.1} parent=23 // pred_region
          %144 = dma.done %s137, 512
        $region28: #{tpu_custom_call.1} parent=23 // pred_fallthru
          _
        %s145 = sand.u32 %s40, 1
        %s146 = scalar_lea.sflag [#allocation4], %s145
        %s147 = sand.u32 %s40, 1
        %s148 = smul.addr %s147, 32
        %s149 = scalar_lea.vmem [#allocation3], %s148
        %p150 = pneg %p53
        %p151 = pneg %p50
        %p152 = pneg %p79
        %p153 = pneg %p76
        %s154 = sand.u32 %s66, 1
        %s155 = scalar_lea.sflag [#allocation5], %s154
        %s156 = sand.u32 %s66, 1
        %s157 = smul.addr %s156, 4
        %s158 = scalar_lea.vmem [#allocation6], %s157
        %s159 = smul.u32 2, %s22
        %s160 = ssub.s32 3, %s159
        %p161 = scmp.lt.s32.totalorder %s160, 2
        %s162 = scalar_select %p161, %s160, 2
        %s163 = smul.u32 128, %s162
        %s164 = smul.u32 %s163, 2
        %s165 = smul.u32 2, %s22
        %s166 = ssub.s32 3, %s165
        %p167 = scmp.lt.s32.totalorder %s166, 2
        %s168 = scalar_select %p167, %s166, 2
        %s169 = smul.u32 16, %s168
        %s170 = smul.u32 %s169, 2
        %p171 = scmp.eq.s32.totalorder %s23, 0
        // Predicated region
        $region29: #{tpu_custom_call.1} parent=23 // pred_check
          %p172 = pneg %p171
        $region30: #{tpu_custom_call.1} parent=23 // pred_check_branch
          %174 = sbr.rel (%p172) target = $region32
        $region31: #{tpu_custom_call.1} parent=23 // pred_region
          %v175 = vlaneseq
          %vm176 = vcmp.ge.s32.totalorder %v175, 0
          %vm177 = vcmp.lt.s32.totalorder %v175, 256
          %vm178 = vmand %vm176, %vm177
          %179 = vst.msk [vmem:[#allocation2] sm:$0x3] %vm178, 0.0
          %180 = vst.msk [vmem:[#allocation2 + $0x2] sm:$0x3] %vm178, 0.0
        $region32: #{tpu_custom_call.1} parent=23 // pred_fallthru
          _
        %p181 = scmp.lt.s32.totalorder %s23, 1
        // Predicated region
        $region33: #{tpu_custom_call.1} parent=23 // pred_check
          %p182 = pneg %p181
        $region34: #{tpu_custom_call.1} parent=23 // pred_check_branch
          %184 = sbr.rel (%p182) target = $region36
        $region35: #{tpu_custom_call.1} parent=23 // pred_region
          %v185 = vld [vmem:[%s140] sm:$0xff]
          %v186 = vld [vmem:[%s140 + $0x8] sm:$0xff]
          %v187 = vld [vmem:[%s140 + $0x10] sm:$0xff]
          %v188 = vld [vmem:[%s140 + $0x18] sm:$0xff]
          %v189 = vld [vmem:[#allocation2] sm:$0x3]
          %v190 = vld [vmem:[#allocation2 + $0x2] sm:$0x3]
          %v191 = vrot.slane %v185, 4
          %v192 = vadd.f32 %v185, %v191
          %v193 = vrot.slane %v192, 2
          %v194 = vadd.f32 %v192, %v193
          %v195 = vrot.slane %v194, 1
          %v196 = vadd.f32 %v194, %v195
          %v197 = vrot.slane %v186, 4
          %v198 = vadd.f32 %v186, %v197
          %v199 = vrot.slane %v198, 2
          %v200 = vadd.f32 %v198, %v199
          %v201 = vrot.slane %v200, 1
          %v202 = vadd.f32 %v200, %v201
          %v203 = vrot.slane %v187, 4
          %v204 = vadd.f32 %v187, %v203
          %v205 = vrot.slane %v204, 2
          %v206 = vadd.f32 %v204, %v205
          %v207 = vrot.slane %v206, 1
          %v208 = vadd.f32 %v206, %v207
          %v209 = vrot.slane %v188, 4
          %v210 = vadd.f32 %v188, %v209
          %v211 = vrot.slane %v210, 2
          %v212 = vadd.f32 %v210, %v211
          %v213 = vrot.slane %v212, 1
          %v214 = vadd.f32 %v212, %v213
          %v219 = vcombine.low %v196, %v202
          %v221 = vunpack.c.l.s4 1966171168
          %v222 = vunpack.c.0.s8 %v221
          %v223 = vlaneseq
          %v224 = vshrl.u32 %v223, 7
          %v225 = vsub.s32 %v222, %v224
          %v226 = vrot.slane %v219, %v225
          %v228 = vunpack.c.l.s4 1966171168
          %v229 = vunpack.c.0.s8 %v228
          %v230 = vlaneseq
          %v231 = vshrl.u32 %v230, 7
          %v232 = vsub.s32 %v229, %v231
          %v233 = vrot.slane %v226, %v232
          %v234 = vcombine.low %v208, %v214
          %v236 = vunpack.c.l.s4 1966171168
          %v237 = vunpack.c.0.s8 %v236
          %v238 = vlaneseq
          %v239 = vshrl.u32 %v238, 7
          %v240 = vsub.s32 %v237, %v239
          %v241 = vrot.slane %v234, %v240
          %v243 = vunpack.c.l.s4 1966171168
          %v244 = vunpack.c.0.s8 %v243
          %v245 = vlaneseq
          %v246 = vshrl.u32 %v245, 7
          %v247 = vsub.s32 %v244, %v246
          %v248 = vrot.slane %v241, %v247
          %v251 = vadd.f32 %v189, %v233
          %v252 = vadd.f32 %v190, %v248
          %v253 = vlaneseq
          %vm254 = vcmp.ge.s32.totalorder %v253, 0
          %vm255 = vcmp.lt.s32.totalorder %v253, 256
          %vm256 = vmand %vm254, %vm255
          %257 = vst.msk [vmem:[#allocation2] sm:$0x3] %vm256, %v251
          %258 = vst.msk [vmem:[#allocation2 + $0x2] sm:$0x3] %vm256, %v252
        $region36: #{tpu_custom_call.1} parent=23 // pred_fallthru
          _
        %p259 = scmp.eq.s32.totalorder %s23, 1
        // Predicated region
        $region37: #{tpu_custom_call.1} parent=23 // pred_check
          %p260 = pneg %p259
        $region38: #{tpu_custom_call.1} parent=23 // pred_check_branch
          %262 = sbr.rel (%p260) target = $region40
        $region39: #{tpu_custom_call.1} parent=23 // pred_region
          %v263 = vld [vmem:[%s140] sm:$0xff]
          %v264 = vld [vmem:[%s140 + $0x8] sm:$0xff]
          %v265 = vld [vmem:[%s140 + $0x10] sm:$0xff]
          %v266 = vld [vmem:[%s140 + $0x18] sm:$0xff]
          %v267 = vlaneseq
          %v268 = vshrl.u32 %v267, 7
          %vm269 = vcmp.lt.s32.totalorder %v268, 4
          %v270 = vsel %vm269, 1, 0
          %vm271 = vcmp.eq.s32.totalorder %v270, 1
          %v272 = vsel %vm271, %v263, 0.0
          %v273 = vsel %vm271, %v264, 0.0
          %v274 = vsel %vm271, %v265, 0.0
          %v275 = vsel %vm271, %v266, 0.0
          %v276 = vld [vmem:[#allocation2] sm:$0x3]
          %v277 = vld [vmem:[#allocation2 + $0x2] sm:$0x3]
          %v278 = vrot.slane %v272, 4
          %v279 = vadd.f32 %v272, %v278
          %v280 = vrot.slane %v279, 2
          %v281 = vadd.f32 %v279, %v280
          %v282 = vrot.slane %v281, 1
          %v283 = vadd.f32 %v281, %v282
          %v284 = vrot.slane %v273, 4
          %v285 = vadd.f32 %v273, %v284
          %v286 = vrot.slane %v285, 2
          %v287 = vadd.f32 %v285, %v286
          %v288 = vrot.slane %v287, 1
          %v289 = vadd.f32 %v287, %v288
          %v290 = vrot.slane %v274, 4
          %v291 = vadd.f32 %v274, %v290
          %v292 = vrot.slane %v291, 2
          %v293 = vadd.f32 %v291, %v292
          %v294 = vrot.slane %v293, 1
          %v295 = vadd.f32 %v293, %v294
          %v296 = vrot.slane %v275, 4
          %v297 = vadd.f32 %v275, %v296
          %v298 = vrot.slane %v297, 2
          %v299 = vadd.f32 %v297, %v298
          %v300 = vrot.slane %v299, 1
          %v301 = vadd.f32 %v299, %v300
          %v306 = vcombine.low %v283, %v289
          %v308 = vunpack.c.l.s4 1966171168
          %v309 = vunpack.c.0.s8 %v308
          %v310 = vlaneseq
          %v311 = vshrl.u32 %v310, 7
          %v312 = vsub.s32 %v309, %v311
          %v313 = vrot.slane %v306, %v312
          %v315 = vunpack.c.l.s4 1966171168
          %v316 = vunpack.c.0.s8 %v315
          %v317 = vlaneseq
          %v318 = vshrl.u32 %v317, 7
          %v319 = vsub.s32 %v316, %v318
          %v320 = vrot.slane %v313, %v319
          %v321 = vcombine.low %v295, %v301
          %v323 = vunpack.c.l.s4 1966171168
          %v324 = vunpack.c.0.s8 %v323
          %v325 = vlaneseq
          %v326 = vshrl.u32 %v325, 7
          %v327 = vsub.s32 %v324, %v326
          %v328 = vrot.slane %v321, %v327
          %v330 = vunpack.c.l.s4 1966171168
          %v331 = vunpack.c.0.s8 %v330
          %v332 = vlaneseq
          %v333 = vshrl.u32 %v332, 7
          %v334 = vsub.s32 %v331, %v333
          %v335 = vrot.slane %v328, %v334
          %v338 = vadd.f32 %v276, %v320
          %v339 = vadd.f32 %v277, %v335
          %v340 = vlaneseq
          %vm341 = vcmp.ge.s32.totalorder %v340, 0
          %vm342 = vcmp.lt.s32.totalorder %v340, 256
          %vm343 = vmand %vm341, %vm342
          %344 = vst.msk [vmem:[#allocation2] sm:$0x3] %vm343, %v338
          %345 = vst.msk [vmem:[#allocation2 + $0x2] sm:$0x3] %vm343, %v339
          %v346 = vld [vmem:[#allocation2] sm:$0x3]
          %v347 = vld [vmem:[#allocation2 + $0x2] sm:$0x3]
          %v348 = vmul.f32 %v346, 0.083333336
          %v349 = vmul.f32 %v347, 0.083333336
          %v350 = vxor.u32 %v348, 2147483648
          %v351 = vxor.u32 %v349, 2147483648
          %v352 = vmul.f32 %v350, 1.442695
          %v353 = vpow.pop %v352
          %v354 = vmul.f32 %v351, 1.442695
          %v355 = vpow.pop %v354
          %v356 = vadd.f32 %v353, 1.0
          %v357 = vadd.f32 %v355, 1.0
          %v358 = vrcp.pop %v356
          %v359 = vmul.f32 1.0, %v358
          %v360 = vrcp.pop %v357
          %v361 = vmul.f32 1.0, %v360
          %362 = vst.msk [vmem:[%s158] sm:$0x3] %vm343, %v359
          %363 = vst.msk [vmem:[%s158 + $0x2] sm:$0x3] %vm343, %v361
        $region40: #{tpu_custom_call.1} parent=23 // pred_fallthru
          _
        %s364 = sand.u32 %s66, 1
        %s365 = scalar_lea.sflag [#allocation5], %s364
        %s366 = sand.u32 %s66, 1
        %s367 = smul.addr %s366, 4
        %s368 = scalar_lea.vmem [#allocation6], %s367
        // Predicated region
        $region41: #{tpu_custom_call.1} parent=23 // pred_check
          %p369 = pneg %p76
        $region42: #{tpu_custom_call.1} parent=23 // pred_check_branch
          %371 = sbr.rel (%p369) target = $region44
        $region43: #{tpu_custom_call.1} parent=23 // pred_region
          %s372 = smul.u32 2, %s22
          %s373 = ssub.s32 3, %s372
          %p374 = scmp.lt.s32.totalorder %s373, 2
          %s375 = scalar_select %p374, %s373, 2
          %s376 = smul.u32 16, %s375
          %s377 = smul.u32 %s376, 2
          %s379 = ssub.s32 64, %s377
          %380 = vsyncadd %s365, %s379
          %p381 = scmp.ne.s32.totalorder 0, %s377
          %s382 = smul.addr %s372, 2
          %s383 = smul.addr %s382, 16
          %s384 = scalar_lea.hbm %s1, %s383
          %s385 = smul.u32 2, %s375
          %s386 = sshll.u32 %s368, 4
          %s387 = int_to_ptr.vmem [resolvable:$true] %s386
          %s388 = sshll.u32 %s385, 4
          %392 = dma.vmem_to_hbm [thread:$0]  (%p381), %s387, %s388, %s384, %s365, 32, 32, 2
        $region44: #{tpu_custom_call.1} parent=23 // pred_fallthru
          _
      $region24: #{tpu_custom_call.1} parent=5 // pred_fallthru
        _
      %p393 = scmp.le.s32.totalorder 2, %s13
      // Predicated region
      $region45: #{tpu_custom_call.1} parent=5 // pred_check
        %p394 = pneg %p393
      $region46: #{tpu_custom_call.1} parent=5 // pred_check_branch
        %396 = sbr.rel (%p394) target = $region48
      $region47: #{tpu_custom_call.1} parent=5 // pred_region
        %s397 = ssub.s32 %s13, 2
        // Predicated region
        $region49: #{tpu_custom_call.1} parent=47 // pred_check
          %p398 = pneg %p82
        $region50: #{tpu_custom_call.1} parent=47 // pred_check_branch
          %400 = sbr.rel (%p398) target = $region52
        $region51: #{tpu_custom_call.1} parent=47 // pred_region
          %s401 = sand.u32 %s67, 1
          %s402 = scalar_lea.sflag [#allocation5], %s401
          %s403 = sand.u32 %s67, 1
          %s404 = smul.addr %s403, 4
          %s405 = scalar_lea.vmem [#allocation6], %s404
          %406 = dma.done %s402, 64
        $region52: #{tpu_custom_call.1} parent=47 // pred_fallthru
          _
      $region48: #{tpu_custom_call.1} parent=5 // pred_fallthru
        _
    $region6: #{tpu_custom_call.1} parent=1 // loop_footer
      %s17 = sadd.s32 1, %s13
    $region7: #{tpu_custom_call.1} parent=1 // loop_footer_branch
      %12 = sbr.rel target = $region3
    $region8: #{tpu_custom_call.1} parent=1 // loop_exit
      _
    %407 = vsyncpa [#allocation4], 1
    %s408 = scalar_lea.sflag [#allocation4], 1
    %409 = vsyncpa %s408, 1
    %410 = vsyncpa [#allocation5], 1
    %s411 = scalar_lea.sflag [#allocation5], 1
    %412 = vsyncpa %s411, 1

</llo_original>
